<compile_context>
chip_gen: v6e
topology: v6e:2x2x1
jax: 0.10.0
libtpu: 0.0.40
codegen_flags: <defaults>
</compile_context>

<pallas_src>
import jax
import jax.numpy as jnp
from jax import lax
from jax.experimental import pallas as pl
from jax.experimental.pallas import tpu as pltpu


def _round_up(x, m):
    return ((x + m - 1) // m) * m


_MAX_UNROLLED_LAYERS = 8   # above this, use fori_loop to bound vreg live ranges
_LANE = 128                # TPU vreg lane width


# --------------------------------------------------------------------------- #
# Kernel
# --------------------------------------------------------------------------- #
def dcn_kernel(x0_ref, w_ref, b_ref, out_ref):
    """x0_ref: (TB, D) f32, w_ref: (L, D, D) bf16 (nn.Linear 'out x in' layout),
    b_ref: (L, 1, D) f32, out_ref: (TB, D)."""
    x0 = x0_ref[...]                                   # (TB, D) f32, resident
    num_layers = w_ref.shape[0]

    def layer(l, x_l):
        w_l = w_ref[l]                                 # (D, D) bf16
        b_l = b_ref[l]                                 # (1, D) f32
        # nn.Linear: y = x_l @ W^T + b.  Contract the last dim of both operands
        # directly on the MXU (no transpose anywhere); bf16 inputs, f32 accum.
        y = lax.dot_general(
            x_l.astype(jnp.bfloat16), w_l,
            dimension_numbers=(((1,), (1,)), ((), ())),
            preferred_element_type=jnp.float32,
        ) + b_l
        # Cross interaction stays f32 on the VPU (no bf16 VALU on v5e).
        return x_l + x0 * y

    if num_layers <= _MAX_UNROLLED_LAYERS:
        x_l = x0
        for l in range(num_layers):                    # small static unroll
            x_l = layer(l, x_l)
    else:
        # Dynamic loop bounds the live ranges of the matmul temporaries at
        # large L*D so the kernel does not flip into a spill-bound regime.
        x_l = lax.fori_loop(0, num_layers, layer, x0)

    out_ref[...] = x_l.astype(out_ref.dtype)


# --------------------------------------------------------------------------- #
# Wrapper helpers
# --------------------------------------------------------------------------- #
def _prepare_params(weights, biases):
    """One-time parameter prep (in production this happens at checkpoint-load
    time, not per forward).  Returns (w, b, fold, feat):
      w:    (L, D, D) bf16 kernel weights,
      b:    (L, 1, D) f32 kernel biases,
      fold: number of batch rows folded into one kernel row (G),
      feat: kernel feature width D (multiple of 128 -> lane-dense)."""
    L, H, _ = weights.shape
    weights = weights.astype(jnp.float32)
    biases = biases.astype(jnp.float32)
    if H < _LANE and _LANE % H == 0:
        # Fold G rows per lane-row with block-diagonal kron(I_G, W) weights:
        # full 128-lane utilisation with zero extra HBM traffic.
        fold = _LANE // H
        feat = fold * H
        eye = jnp.eye(fold, dtype=jnp.float32)
        w = jnp.einsum("ab,loi->laobi", eye, weights).reshape(L, feat, feat)
        b = jnp.tile(biases, (1, fold))
    else:
        # Zero-pad the feature dim to a multiple of 128.  Padded columns stay
        # exactly 0 through  x_l + x_0 * (x_l @ W^T + b).
        fold = 1
        feat = _round_up(H, _LANE)
        w = jnp.pad(weights, ((0, 0), (0, feat - H), (0, feat - H)))
        b = jnp.pad(biases, ((0, 0), (0, feat - H)))
    return w.astype(jnp.bfloat16), b.reshape(L, 1, feat), fold, feat


def _vmem_budget_bytes():
    try:
        phys = int(pltpu.get_tpu_info().vmem_capacity_bytes)
    except Exception:
        phys = 64 << 20                       # conservative if the query fails
    return max(16 << 20, int(phys * 0.8))     # headroom for compiler scratch


def _choose_batch_tile(rows, tb_max, feat):
    """Pick the batch tile: bounded padding waste, few large tiles, and >= 2
    tiles for big batches so a v7x megacore can split the 'parallel' axis."""
    tb_max = max(8, min(8192, (int(tb_max) // 8) * 8))
    r8 = _round_up(rows, 8)
    if rows < 256 and r8 <= tb_max:
        return r8
    tb_cap = tb_max
    if rows >= 256:
        tb_cap = max(8, min(tb_max, _round_up(pl.cdiv(r8, 2), 8)))
    # Score candidates: fixed per-grid-step overhead (~0.35us expressed as
    # equivalent in+out DMA rows) plus padded-row waste.
    step_rows = max(64, 350_000 // (8 * feat))
    cands = {tb_cap}
    for ntiles in range(2, 65):
        cands.add(max(8, min(tb_cap, _round_up(pl.cdiv(r8, ntiles), 8))))
    best_tb, best_cost = tb_cap, None
    for tb in cands:
        n = pl.cdiv(r8, tb)
        cost = n * step_rows + (n * tb - rows)
        if best_cost is None or cost < best_cost:
            best_tb, best_cost = tb, cost
    return best_tb


def _build_call(rows_padded, tb, num_layers, feat, vmem_limit, out_dtype,
                single_buffer_params):
    # Constant-index resident params: single buffer (no pointless double
    # buffering of the whole weight stack).
    param_mode = {"pipeline_mode": pl.Buffered(1)} if single_buffer_params else {}
    return pl.pallas_call(
        dcn_kernel,
        out_shape=jax.ShapeDtypeStruct((rows_padded, feat), out_dtype),
        grid_spec=pltpu.PrefetchScalarGridSpec(
            num_scalar_prefetch=0,
            grid=(rows_padded // tb,),
            in_specs=[
                pl.BlockSpec((tb, feat), lambda i: (i, 0)),            # x0 tile
                pl.BlockSpec((num_layers, feat, feat),                 # weights
                             lambda i: (0, 0, 0), **param_mode),
                pl.BlockSpec((num_layers, 1, feat),                    # biases
                             lambda i: (0, 0, 0), **param_mode),
            ],
            out_specs=pl.BlockSpec((tb, feat), lambda i: (i, 0)),
        ),
        compiler_params=pltpu.CompilerParams(
            dimension_semantics=("parallel",),
            vmem_limit_bytes=int(vmem_limit),
        ),
    )


# --------------------------------------------------------------------------- #
# Public entry point
# --------------------------------------------------------------------------- #
def dcn_head(x0, weights, biases, out_dtype=jnp.float32):
    """x0: (B, H), weights: (L, H, H) nn.Linear weights, biases: (L, H).
    Returns (B, H) in out_dtype (f32 by default to match the PyTorch module;
    pass bf16 to halve output HBM writeback if the consumer tolerates it)."""
    B, H = x0.shape
    L = weights.shape[0]

    # One-time parameter prep (fold / pad / bf16 cast) — hoist to load time.
    w, b, fold, feat = _prepare_params(weights, biases)

    # Fold / pad activations to the kernel's lane-dense feature width.
    x = x0.astype(jnp.float32)
    if fold > 1:
        b_fold = _round_up(B, fold)
        if b_fold != B:
            x = jnp.pad(x, ((0, b_fold - B), (0, 0)))
        x = x.reshape(b_fold // fold, feat)
    elif feat != H:
        x = jnp.pad(x, ((0, 0), (0, feat - H)))
    rows = x.shape[0]

    # Per-generation VMEM plan: resident single-buffered weight stack + biases;
    # the rest of the budget goes to double-buffered batch tiles.
    budget = _vmem_budget_bytes()
    resident = L * feat * feat * 2 + L * feat * 4
    if resident + 4 * 8 * feat * 4 + (2 << 20) > budget:
        # TODO(synk): weight-streaming grid for very large L*H (esp. v7x 64 MiB).
        raise NotImplementedError(
            "DCN weight stack does not fit resident in VMEM on this chip; "
            "weight-streaming variant not implemented.")
    tb_max = (budget - resident - (2 << 20)) // (16 * feat)
    tb = _choose_batch_tile(rows, tb_max, feat)

    rows_padded = _round_up(rows, tb)
    x_p = jnp.pad(x, ((0, rows_padded - rows), (0, 0))) if rows_padded != rows else x

    # Limit covers the x2 weight buffers of the (defensive) non-Buffered(1)
    # fallback path, clamped to ~80% of the chip's physical VMEM.
    need = 2 * resident + 4 * tb * feat * 4 + (4 << 20)
    vmem_limit = min(budget, max(32 << 20, need))

    out_dtype = jnp.dtype(out_dtype)
    try:
        call = _build_call(rows_padded, tb, L, feat, vmem_limit, out_dtype, True)
        out = call(x_p, w, b)
    except Exception:
        # Defensive fallback if this JAX version rejects pl.Buffered(1).
        call = _build_call(rows_padded, tb, L, feat, vmem_limit, out_dtype, False)
        out = call(x_p, w, b)

    out = out[:rows]
    if fold > 1:
        out = out.reshape(rows * fold, H)[:B]
    else:
        out = out[:B, :H]
    return out


def dcn_head_reference(x0, weights, biases):
    """Pure-JAX reference mirroring the kernel's bf16-weight / f32-accumulate dot."""
    w = weights.astype(jnp.bfloat16).astype(jnp.float32)
    b = biases.astype(jnp.float32)
    x_0 = x0.astype(jnp.float32)
    x_l = x_0
    for l in range(w.shape[0]):
        xq = x_l.astype(jnp.bfloat16).astype(jnp.float32)
        y = xq @ w[l].T + b[l]
        x_l = x_l + x_0 * y
    return x_l


if __name__ == "__main__":
    num_layers = 3
    hidden_size = 32
    batch = 4

    key = jax.random.PRNGKey(0)
    kx, kw, kb = jax.random.split(key, 3)

    x0 = jax.random.normal(kx, (batch, hidden_size), dtype=jnp.float32)
    weights = jax.random.normal(
        kw, (num_layers, hidden_size, hidden_size), dtype=jnp.float32
    ) * (1.0 / jnp.sqrt(hidden_size))
    biases = jax.random.normal(kb, (num_layers, hidden_size), dtype=jnp.float32) * 0.01

    out = dcn_head(x0, weights, biases)
    out = jax.block_until_ready(out)

    ref = dcn_head_reference(x0, weights, biases)
    assert out.shape == (batch, hidden_size)
    assert jnp.allclose(out, ref, atol=1e-3, rtol=1e-3), "mismatch vs reference"

    print("KERNEL_OK")
</pallas_src>

<mosaic_0001>
module attributes {stable_mosaic.version = 11 : i64} {
  func.func @dcn_kernel(%arg0: i32, %arg1: memref<8x128xf32, #tpu.memory_space<vmem>>, %arg2: memref<3x128x128xbf16, #tpu.memory_space<vmem>>, %arg3: memref<3x1x128xf32, #tpu.memory_space<vmem>>, %arg4: memref<8x128xf32, #tpu.memory_space<vmem>>) attributes {dimension_semantics = [#tpu.dimension_semantics<parallel>], iteration_bounds = array<i64: 1>, scalar_prefetch = 0 : i64, scratch_operands = 0 : i64, tpu.core_type = #tpu.core_type<tc>, window_params = [{transform_indices = @transform_0, window_bounds = array<i64: 8, 128>}, {pipeline_mode = #tpu.pipeline_mode<synchronous>, transform_indices = @transform_1, window_bounds = array<i64: 3, 128, 128>}, {pipeline_mode = #tpu.pipeline_mode<synchronous>, transform_indices = @transform_2, window_bounds = array<i64: 3, 1, 128>}, {transform_indices = @transform_3, window_bounds = array<i64: 8, 128>}]} {
    %c0 = arith.constant 0 : index
    %c0_0 = arith.constant 0 : index
    %0 = vector.load %arg1[%c0, %c0_0] : memref<8x128xf32, #tpu.memory_space<vmem>>, vector<8x128xf32>
    %c0_1 = arith.constant 0 : index
    %c0_2 = arith.constant 0 : index
    %c0_3 = arith.constant 0 : index
    %1 = vector.load %arg2[%c0_1, %c0_2, %c0_3] : memref<3x128x128xbf16, #tpu.memory_space<vmem>>, vector<1x128x128xbf16>
    %2 = vector.shape_cast %1 : vector<1x128x128xbf16> to vector<128x128xbf16>
    %c0_4 = arith.constant 0 : index
    %c0_5 = arith.constant 0 : index
    %c0_6 = arith.constant 0 : index
    %3 = vector.load %arg3[%c0_4, %c0_5, %c0_6] : memref<3x1x128xf32, #tpu.memory_space<vmem>>, vector<1x1x128xf32>
    %4 = vector.shape_cast %3 : vector<1x1x128xf32> to vector<1x128xf32>
    %5 = arith.truncf %0 : vector<8x128xf32> to vector<8x128xbf16>
    %cst = arith.constant dense<0.000000e+00> : vector<8x128xf32>
    %6 = tpu.matmul %5, %2, %cst {dimension_numbers = #tpu.dot_dimension_numbers<[1], [1], [0], [0], [0, 0, 1, 0], [], []>} : vector<8x128xbf16>, vector<128x128xbf16>, vector<8x128xf32> -> vector<8x128xf32>
    %7 = vector.broadcast %4 : vector<1x128xf32> to vector<8x128xf32>
    %8 = arith.addf %6, %7 : vector<8x128xf32>
    %9 = arith.mulf %0, %8 : vector<8x128xf32>
    %10 = arith.addf %0, %9 : vector<8x128xf32>
    %c1 = arith.constant 1 : index
    %c0_7 = arith.constant 0 : index
    %c0_8 = arith.constant 0 : index
    %11 = vector.load %arg2[%c1, %c0_7, %c0_8] : memref<3x128x128xbf16, #tpu.memory_space<vmem>>, vector<1x128x128xbf16>
    %12 = vector.shape_cast %11 : vector<1x128x128xbf16> to vector<128x128xbf16>
    %c1_9 = arith.constant 1 : index
    %c0_10 = arith.constant 0 : index
    %c0_11 = arith.constant 0 : index
    %13 = vector.load %arg3[%c1_9, %c0_10, %c0_11] : memref<3x1x128xf32, #tpu.memory_space<vmem>>, vector<1x1x128xf32>
    %14 = vector.shape_cast %13 : vector<1x1x128xf32> to vector<1x128xf32>
    %15 = arith.truncf %10 : vector<8x128xf32> to vector<8x128xbf16>
    %cst_12 = arith.constant dense<0.000000e+00> : vector<8x128xf32>
    %16 = tpu.matmul %15, %12, %cst_12 {dimension_numbers = #tpu.dot_dimension_numbers<[1], [1], [0], [0], [0, 0, 1, 0], [], []>} : vector<8x128xbf16>, vector<128x128xbf16>, vector<8x128xf32> -> vector<8x128xf32>
    %17 = vector.broadcast %14 : vector<1x128xf32> to vector<8x128xf32>
    %18 = arith.addf %16, %17 : vector<8x128xf32>
    %19 = arith.mulf %0, %18 : vector<8x128xf32>
    %20 = arith.addf %10, %19 : vector<8x128xf32>
    %c2 = arith.constant 2 : index
    %c0_13 = arith.constant 0 : index
    %c0_14 = arith.constant 0 : index
    %21 = vector.load %arg2[%c2, %c0_13, %c0_14] : memref<3x128x128xbf16, #tpu.memory_space<vmem>>, vector<1x128x128xbf16>
    %22 = vector.shape_cast %21 : vector<1x128x128xbf16> to vector<128x128xbf16>
    %c2_15 = arith.constant 2 : index
    %c0_16 = arith.constant 0 : index
    %c0_17 = arith.constant 0 : index
    %23 = vector.load %arg3[%c2_15, %c0_16, %c0_17] : memref<3x1x128xf32, #tpu.memory_space<vmem>>, vector<1x1x128xf32>
    %24 = vector.shape_cast %23 : vector<1x1x128xf32> to vector<1x128xf32>
    %25 = arith.truncf %20 : vector<8x128xf32> to vector<8x128xbf16>
    %cst_18 = arith.constant dense<0.000000e+00> : vector<8x128xf32>
    %26 = tpu.matmul %25, %22, %cst_18 {dimension_numbers = #tpu.dot_dimension_numbers<[1], [1], [0], [0], [0, 0, 1, 0], [], []>} : vector<8x128xbf16>, vector<128x128xbf16>, vector<8x128xf32> -> vector<8x128xf32>
    %27 = vector.broadcast %24 : vector<1x128xf32> to vector<8x128xf32>
    %28 = arith.addf %26, %27 : vector<8x128xf32>
    %29 = arith.mulf %0, %28 : vector<8x128xf32>
    %30 = arith.addf %20, %29 : vector<8x128xf32>
    %c0_19 = arith.constant 0 : index
    %c0_20 = arith.constant 0 : index
    %31 = vector.load %arg4[%c0_19, %c0_20] : memref<8x128xf32, #tpu.memory_space<vmem>>, vector<8x128xf32>
    tpu.vector_store %arg4[%c0_19, %c0_20], %30 {strides = array<i32>} : memref<8x128xf32, #tpu.memory_space<vmem>>, vector<8x128xf32>,
    return
  }
  func.func @transform_0(%arg0: i32) -> (i32, i32) {
    %c0_i32 = arith.constant 0 : i32
    %c0_i32_0 = arith.constant 0 : i32
    return %arg0, %c0_i32 : i32, i32
  }
  func.func @transform_1(%arg0: i32) -> (i32, i32, i32) {
    %c0_i32 = arith.constant 0 : i32
    %c0_i32_0 = arith.constant 0 : i32
    %c0_i32_1 = arith.constant 0 : i32
    %c0_i32_2 = arith.constant 0 : i32
    return %c0_i32, %c0_i32_0, %c0_i32_1 : i32, i32, i32
  }
  func.func @transform_2(%arg0: i32) -> (i32, i32, i32) {
    %c0_i32 = arith.constant 0 : i32
    %c0_i32_0 = arith.constant 0 : i32
    %c0_i32_1 = arith.constant 0 : i32
    %c0_i32_2 = arith.constant 0 : i32
    return %c0_i32, %c0_i32_0, %c0_i32_1 : i32, i32, i32
  }
  func.func @transform_3(%arg0: i32) -> (i32, i32) {
    %c0_i32 = arith.constant 0 : i32
    %c0_i32_0 = arith.constant 0 : i32
    return %arg0, %c0_i32 : i32, i32
  }
}

module attributes {stable_mosaic.version = 11 : i64} {
  func.func @dcn_kernel(%arg0: i32, %arg1: memref<8x128xf32, #tpu.memory_space<vmem>>, %arg2: memref<3x128x128xbf16, #tpu.memory_space<vmem>>, %arg3: memref<3x1x128xf32, #tpu.memory_space<vmem>>, %arg4: memref<8x128xf32, #tpu.memory_space<vmem>>) attributes {dimension_semantics = [#tpu.dimension_semantics<parallel>], iteration_bounds = array<i64: 1>, scalar_prefetch = 0 : i64, scratch_operands = 0 : i64, tpu.core_type = #tpu.core_type<tc>, window_params = [{transform_indices = @transform_0, window_bounds = array<i64: 8, 128>}, {pipeline_mode = #tpu.pipeline_mode<synchronous>, transform_indices = @transform_1, window_bounds = array<i64: 3, 128, 128>}, {pipeline_mode = #tpu.pipeline_mode<synchronous>, transform_indices = @transform_2, window_bounds = array<i64: 3, 1, 128>}, {transform_indices = @transform_3, window_bounds = array<i64: 8, 128>}]} {
    %c0 = arith.constant 0 : index
    %c0_0 = arith.constant 0 : index
    %0 = vector.load %arg1[%c0, %c0_0] : memref<8x128xf32, #tpu.memory_space<vmem>>, vector<8x128xf32>
    %c0_1 = arith.constant 0 : index
    %c0_2 = arith.constant 0 : index
    %c0_3 = arith.constant 0 : index
    %1 = vector.load %arg2[%c0_1, %c0_2, %c0_3] : memref<3x128x128xbf16, #tpu.memory_space<vmem>>, vector<1x128x128xbf16>
    %2 = vector.shape_cast %1 : vector<1x128x128xbf16> to vector<128x128xbf16>
    %c0_4 = arith.constant 0 : index
    %c0_5 = arith.constant 0 : index
    %c0_6 = arith.constant 0 : index
    %3 = vector.load %arg3[%c0_4, %c0_5, %c0_6] : memref<3x1x128xf32, #tpu.memory_space<vmem>>, vector<1x1x128xf32>
    %4 = vector.shape_cast %3 : vector<1x1x128xf32> to vector<1x128xf32>
    %5 = arith.truncf %0 : vector<8x128xf32> to vector<8x128xbf16>
    %cst = arith.constant dense<0.000000e+00> : vector<8x128xf32>
    %6 = tpu.matmul %5, %2, %cst {dimension_numbers = #tpu.dot_dimension_numbers<[1], [1], [0], [0], [0, 0, 1, 0], [], []>} : vector<8x128xbf16>, vector<128x128xbf16>, vector<8x128xf32> -> vector<8x128xf32>
    %7 = vector.broadcast %4 : vector<1x128xf32> to vector<8x128xf32>
    %8 = arith.addf %6, %7 : vector<8x128xf32>
    %9 = arith.mulf %0, %8 : vector<8x128xf32>
    %10 = arith.addf %0, %9 : vector<8x128xf32>
    %c1 = arith.constant 1 : index
    %c0_7 = arith.constant 0 : index
    %c0_8 = arith.constant 0 : index
    %11 = vector.load %arg2[%c1, %c0_7, %c0_8] : memref<3x128x128xbf16, #tpu.memory_space<vmem>>, vector<1x128x128xbf16>
    %12 = vector.shape_cast %11 : vector<1x128x128xbf16> to vector<128x128xbf16>
    %c1_9 = arith.constant 1 : index
    %c0_10 = arith.constant 0 : index
    %c0_11 = arith.constant 0 : index
    %13 = vector.load %arg3[%c1_9, %c0_10, %c0_11] : memref<3x1x128xf32, #tpu.memory_space<vmem>>, vector<1x1x128xf32>
    %14 = vector.shape_cast %13 : vector<1x1x128xf32> to vector<1x128xf32>
    %15 = arith.truncf %10 : vector<8x128xf32> to vector<8x128xbf16>
    %cst_12 = arith.constant dense<0.000000e+00> : vector<8x128xf32>
    %16 = tpu.matmul %15, %12, %cst_12 {dimension_numbers = #tpu.dot_dimension_numbers<[1], [1], [0], [0], [0, 0, 1, 0], [], []>} : vector<8x128xbf16>, vector<128x128xbf16>, vector<8x128xf32> -> vector<8x128xf32>
    %17 = vector.broadcast %14 : vector<1x128xf32> to vector<8x128xf32>
    %18 = arith.addf %16, %17 : vector<8x128xf32>
    %19 = arith.mulf %0, %18 : vector<8x128xf32>
    %20 = arith.addf %10, %19 : vector<8x128xf32>
    %c2 = arith.constant 2 : index
    %c0_13 = arith.constant 0 : index
    %c0_14 = arith.constant 0 : index
    %21 = vector.load %arg2[%c2, %c0_13, %c0_14] : memref<3x128x128xbf16, #tpu.memory_space<vmem>>, vector<1x128x128xbf16>
    %22 = vector.shape_cast %21 : vector<1x128x128xbf16> to vector<128x128xbf16>
    %c2_15 = arith.constant 2 : index
    %c0_16 = arith.constant 0 : index
    %c0_17 = arith.constant 0 : index
    %23 = vector.load %arg3[%c2_15, %c0_16, %c0_17] : memref<3x1x128xf32, #tpu.memory_space<vmem>>, vector<1x1x128xf32>
    %24 = vector.shape_cast %23 : vector<1x1x128xf32> to vector<1x128xf32>
    %25 = arith.truncf %20 : vector<8x128xf32> to vector<8x128xbf16>
    %cst_18 = arith.constant dense<0.000000e+00> : vector<8x128xf32>
    %26 = tpu.matmul %25, %22, %cst_18 {dimension_numbers = #tpu.dot_dimension_numbers<[1], [1], [0], [0], [0, 0, 1, 0], [], []>} : vector<8x128xbf16>, vector<128x128xbf16>, vector<8x128xf32> -> vector<8x128xf32>
    %27 = vector.broadcast %24 : vector<1x128xf32> to vector<8x128xf32>
    %28 = arith.addf %26, %27 : vector<8x128xf32>
    %29 = arith.mulf %0, %28 : vector<8x128xf32>
    %30 = arith.addf %20, %29 : vector<8x128xf32>
    %c0_19 = arith.constant 0 : index
    %c0_20 = arith.constant 0 : index
    %31 = vector.load %arg4[%c0_19, %c0_20] : memref<8x128xf32, #tpu.memory_space<vmem>>, vector<8x128xf32>
    tpu.vector_store %arg4[%c0_19, %c0_20], %30 {strides = array<i32>} : memref<8x128xf32, #tpu.memory_space<vmem>>, vector<8x128xf32>,
    return
  }
  func.func @transform_0(%arg0: i32) -> (i32, i32) {
    %c0_i32 = arith.constant 0 : i32
    %c0_i32_0 = arith.constant 0 : i32
    return %arg0, %c0_i32 : i32, i32
  }
  func.func @transform_1(%arg0: i32) -> (i32, i32, i32) {
    %c0_i32 = arith.constant 0 : i32
    %c0_i32_0 = arith.constant 0 : i32
    %c0_i32_1 = arith.constant 0 : i32
    %c0_i32_2 = arith.constant 0 : i32
    return %c0_i32, %c0_i32_0, %c0_i32_1 : i32, i32, i32
  }
  func.func @transform_2(%arg0: i32) -> (i32, i32, i32) {
    %c0_i32 = arith.constant 0 : i32
    %c0_i32_0 = arith.constant 0 : i32
    %c0_i32_1 = arith.constant 0 : i32
    %c0_i32_2 = arith.constant 0 : i32
    return %c0_i32, %c0_i32_0, %c0_i32_1 : i32, i32, i32
  }
  func.func @transform_3(%arg0: i32) -> (i32, i32) {
    %c0_i32 = arith.constant 0 : i32
    %c0_i32_0 = arith.constant 0 : i32
    return %arg0, %c0_i32 : i32, i32
  }
}

</mosaic_0001>

<llo_original>
// kernel: tpu_custom_call.1
$region0: #{tpu_custom_call.1}
  #allocation0 [shape = 'u32[]', space=smem, size = 0x4, offset = 0x4, fixed_abs, tag = 'smem constant byte address 0x4 - core index']
  #allocation1 [shape = 'u32[144,128]{1,0:T(1,128)}', space=vmem, size = 0x12000, scoped, tag = 'internal scratch']
  %s0 = inlined_call_operand.hbm [shape: f32[8,128], index: 0, kind: input, shape index: {}]
  %s1 = inlined_call_operand.hbm [shape: bf16[3,128,128], index: 1, kind: input, shape index: {}]
  %s2 = inlined_call_operand.vmem [shape: f32[3,1,128], index: 2, kind: input, shape index: {}]
  %s3 = inlined_call_operand.hbm [shape: f32[8,128], index: 3, kind: output, shape index: {}]
  %s4 = sld [smem:[#allocation0]]
  $region30: #{tpu_custom_call.1} parent=0
    _
  %s6 = ssub.s32 1, %s4
  %s7 = scalar_select 0, %s6, %s4
  $region1: #{tpu_custom_call.1} parent=0
    #allocation2 [shape = 'u8[4096]{0}', space=vmem, size = 0x1000, scoped, tag = 'input window, operand 0, single buffered']
    #allocation3 [shape = 's32[1]{0}', space=sflag, size = 0x4, scoped, tag = 'scoped memory for tpu_custom_call.1']
    #allocation4 [shape = 's32[1]{0}', space=sflag, size = 0x4, scoped, tag = 'scoped memory for tpu_custom_call.1']
    #allocation5 [shape = 'u8[98304]{0}', space=vmem, size = 0x18000, scoped, tag = 'input window, operand 1, single buffered']
    #allocation6 [shape = 's32[1]{0}', space=sflag, size = 0x4, scoped, tag = 'scoped memory for tpu_custom_call.1']
    #allocation7 [shape = 'u8[4096]{0}', space=vmem, size = 0x1000, scoped, tag = 'output window, operand 0, single buffered']
    %8 = vsyncpa [#allocation3], 0
    %9 = vsyncpa [#allocation6], 0
    %10 = vsyncpa [#allocation4], 0
    // Predicated region
    $region2: #{tpu_custom_call.1} parent=1 // pred_check
      _
    $region3: #{tpu_custom_call.1} parent=1 // pred_check_branch
      %12 = sbr.rel (0) target = $region5
    $region4: #{tpu_custom_call.1} parent=1 // pred_region
      %s14 = ssub.s32 128, 128
      %15 = vsyncadd [#allocation3], %s14
      %s17 = sshll.u32 [#allocation2], 4
      %s18 = int_to_ptr.vmem [resolvable:$true] %s17
      %20 = dma.hbm_to_vmem [thread:$0]  %s0, 128, %s18, [#allocation3]
    $region5: #{tpu_custom_call.1} parent=1 // pred_fallthru
      _
    // Predicated region
    $region6: #{tpu_custom_call.1} parent=1 // pred_check
      _
    $region7: #{tpu_custom_call.1} parent=1 // pred_check_branch
      %22 = sbr.rel (0) target = $region9
    $region8: #{tpu_custom_call.1} parent=1 // pred_region
      %s24 = ssub.s32 3072, 3072
      %25 = vsyncadd [#allocation6], %s24
      %s26 = sshll.u32 [#allocation5], 4
      %s27 = int_to_ptr.vmem [resolvable:$true] %s26
      %32 = dma.hbm_to_vmem [thread:$0]  %s1, 3072, %s27, [#allocation6], 64, 64, 4
    $region9: #{tpu_custom_call.1} parent=1 // pred_fallthru
      _
    // Predicated region
    $region10: #{tpu_custom_call.1} parent=1 // pred_check
      _
    $region11: #{tpu_custom_call.1} parent=1 // pred_check_branch
      %34 = sbr.rel (0) target = $region13
    $region12: #{tpu_custom_call.1} parent=1 // pred_region
      _
    $region13: #{tpu_custom_call.1} parent=1 // pred_fallthru
      _
    // Predicated region
    $region14: #{tpu_custom_call.1} parent=1 // pred_check
      _
    $region15: #{tpu_custom_call.1} parent=1 // pred_check_branch
      %36 = sbr.rel (0) target = $region17
    $region16: #{tpu_custom_call.1} parent=1 // pred_region
      %37 = dma.done [#allocation3], 128
    $region17: #{tpu_custom_call.1} parent=1 // pred_fallthru
      _
    // Predicated region
    $region18: #{tpu_custom_call.1} parent=1 // pred_check
      _
    $region19: #{tpu_custom_call.1} parent=1 // pred_check_branch
      %39 = sbr.rel (0) target = $region21
    $region20: #{tpu_custom_call.1} parent=1 // pred_region
      %40 = dma.done [#allocation6], 3072
    $region21: #{tpu_custom_call.1} parent=1 // pred_fallthru
      _
    %v42 = vld [vmem:[#allocation2] sm:$0xff]
    %v43 = vld [vmem:[#allocation5] sm:$0xf]
    %v44 = vld [vmem:[#allocation5 + $0x4] sm:$0xf]
    %v45 = vld [vmem:[#allocation5 + $0x8] sm:$0xf]
    %v46 = vld [vmem:[#allocation5 + $0xc] sm:$0xf]
    %v47 = vld [vmem:[#allocation5 + $0x10] sm:$0xf]
    %v48 = vld [vmem:[#allocation5 + $0x14] sm:$0xf]
    %v49 = vld [vmem:[#allocation5 + $0x18] sm:$0xf]
    %v50 = vld [vmem:[#allocation5 + $0x1c] sm:$0xf]
    %v51 = vld [vmem:[#allocation5 + $0x20] sm:$0xf]
    %v52 = vld [vmem:[#allocation5 + $0x24] sm:$0xf]
    %v53 = vld [vmem:[#allocation5 + $0x28] sm:$0xf]
    %v54 = vld [vmem:[#allocation5 + $0x2c] sm:$0xf]
    %v55 = vld [vmem:[#allocation5 + $0x30] sm:$0xf]
    %v56 = vld [vmem:[#allocation5 + $0x34] sm:$0xf]
    %v57 = vld [vmem:[#allocation5 + $0x38] sm:$0xf]
    %v58 = vld [vmem:[#allocation5 + $0x3c] sm:$0xf]
    %v59 = vld [vmem:[%s2] sm:$0x1]
    %v60 = vpack.c.bf16 %v42, %v42
    %v62 = vlaneseq
    %v63 = vshrl.u32 %v62, 7
    %v64 = vsub.s32 0, %v63
    %v65 = vrot.slane %v59, %v64
    %v83 = vunpack.c.l.b16 %v43
    %v84 = vunpack.c.l.b16 %v44
    %v85 = vunpack.c.l.b16 %v45
    %v86 = vunpack.c.l.b16 %v46
    %v87 = vunpack.c.l.b16 %v47
    %v88 = vunpack.c.l.b16 %v48
    %v89 = vunpack.c.l.b16 %v49
    %v90 = vunpack.c.l.b16 %v50
    %v91 = vunpack.c.l.b16 %v51
    %v92 = vunpack.c.l.b16 %v52
    %v93 = vunpack.c.l.b16 %v53
    %v94 = vunpack.c.l.b16 %v54
    %v95 = vunpack.c.l.b16 %v55
    %v96 = vunpack.c.l.b16 %v56
    %v97 = vunpack.c.l.b16 %v57
    %v98 = vunpack.c.l.b16 %v58
    %v99 = vpack.c.b16 %v84, %v83
    %v100 = vpack.c.b16 %v86, %v85
    %v101 = vpack.c.b16 %v88, %v87
    %v102 = vpack.c.b16 %v90, %v89
    %v103 = vpack.c.b16 %v92, %v91
    %v104 = vpack.c.b16 %v94, %v93
    %v105 = vpack.c.b16 %v96, %v95
    %v106 = vpack.c.b16 %v98, %v97
    %115 = vmatprep.subr.bf16.mxu0 0
    %116 = vmatpush1.bf16.xpose.msra.mxu0 %v106
    %117 = vmatprep.subr.bf16.mxu0 0
    %118 = vmatpush1.bf16.xpose.msra.mxu0 %v105
    %119 = vmatprep.subr.bf16.mxu0 0
    %120 = vmatpush1.bf16.xpose.msra.mxu0 %v104
    %121 = vmatprep.subr.bf16.mxu0 0
    %122 = vmatpush1.bf16.xpose.msra.mxu0 %v103
    %123 = vmatprep.subr.bf16.mxu0 0
    %124 = vmatpush1.bf16.xpose.msra.mxu0 %v102
    %125 = vmatprep.subr.bf16.mxu0 0
    %126 = vmatpush1.bf16.xpose.msra.mxu0 %v101
    %127 = vmatprep.subr.bf16.mxu0 0
    %128 = vmatpush1.bf16.xpose.msra.mxu0 %v100
    %129 = vmatprep.subr.bf16.mxu0 0
    %130 = vmatpush1.bf16.xpose.msra.mxu0 %v99
    %131 = vmatprep.subr.bf16.mxu0 0
    %132 = vmatpush2.bf16.xpose.msra.mxu0 0
    %133 = vmatprep.subr.bf16.mxu0 0
    %134 = vmatpush2.bf16.xpose.msra.mxu0 0
    %135 = vmatprep.subr.bf16.mxu0 0
    %136 = vmatpush2.bf16.xpose.msra.mxu0 0
    %137 = vmatprep.subr.bf16.mxu0 0
    %138 = vmatpush2.bf16.xpose.msra.mxu0 0
    %139 = vmatprep.subr.bf16.mxu0 0
    %140 = vmatpush2.bf16.xpose.msra.mxu0 0
    %141 = vmatprep.subr.bf16.mxu0 0
    %142 = vmatpush2.bf16.xpose.msra.mxu0 0
    %143 = vmatprep.subr.bf16.mxu0 0
    %144 = vmatpush2.bf16.xpose.msra.mxu0 0
    %145 = vmatprep.subr.bf16.mxu0 0
    %146 = vmatpush2.bf16.xpose.msra.mxu0 0
    %147 = vmatprep.mubr.bf16.mxu0 0
    %148 = vmatmul.mubr.bf16.gmra.mxu0 %v60
    %v149 = vpop.f32.mrf.mxu0
    %v150 = vadd.f32 %v65, %v149
    %v151 = vpop.f32.mrf.mxu0
    %v152 = vpop.f32.mrf.mxu0
    %v153 = vpop.f32.mrf.mxu0
    %154 = vdwg.mxu0
    %v155 = vmul.f32 %v42, %v150
    %v156 = vadd.f32 %v42, %v155
    %s157 = scalar_lea.vmem [#allocation5], 64
    %v158 = vld [vmem:[%s157] sm:$0xf]
    %v159 = vld [vmem:[%s157 + $0x4] sm:$0xf]
    %v160 = vld [vmem:[%s157 + $0x8] sm:$0xf]
    %v161 = vld [vmem:[%s157 + $0xc] sm:$0xf]
    %v162 = vld [vmem:[%s157 + $0x10] sm:$0xf]
    %v163 = vld [vmem:[%s157 + $0x14] sm:$0xf]
    %v164 = vld [vmem:[%s157 + $0x18] sm:$0xf]
    %v165 = vld [vmem:[%s157 + $0x1c] sm:$0xf]
    %v166 = vld [vmem:[%s157 + $0x20] sm:$0xf]
    %v167 = vld [vmem:[%s157 + $0x24] sm:$0xf]
    %v168 = vld [vmem:[%s157 + $0x28] sm:$0xf]
    %v169 = vld [vmem:[%s157 + $0x2c] sm:$0xf]
    %v170 = vld [vmem:[%s157 + $0x30] sm:$0xf]
    %v171 = vld [vmem:[%s157 + $0x34] sm:$0xf]
    %v172 = vld [vmem:[%s157 + $0x38] sm:$0xf]
    %v173 = vld [vmem:[%s157 + $0x3c] sm:$0xf]
    %s174 = scalar_lea.vmem %s2, 1
    %v175 = vld [vmem:[%s174] sm:$0x1]
    %v176 = vpack.c.bf16 %v156, %v156
    %v178 = vlaneseq
    %v179 = vshrl.u32 %v178, 7
    %v180 = vsub.s32 0, %v179
    %v181 = vrot.slane %v175, %v180
    %v199 = vunpack.c.l.b16 %v158
    %v200 = vunpack.c.l.b16 %v159
    %v201 = vunpack.c.l.b16 %v160
    %v202 = vunpack.c.l.b16 %v161
    %v203 = vunpack.c.l.b16 %v162
    %v204 = vunpack.c.l.b16 %v163
    %v205 = vunpack.c.l.b16 %v164
    %v206 = vunpack.c.l.b16 %v165
    %v207 = vunpack.c.l.b16 %v166
    %v208 = vunpack.c.l.b16 %v167
    %v209 = vunpack.c.l.b16 %v168
    %v210 = vunpack.c.l.b16 %v169
    %v211 = vunpack.c.l.b16 %v170
    %v212 = vunpack.c.l.b16 %v171
    %v213 = vunpack.c.l.b16 %v172
    %v214 = vunpack.c.l.b16 %v173
    %v215 = vpack.c.b16 %v200, %v199
    %v216 = vpack.c.b16 %v202, %v201
    %v217 = vpack.c.b16 %v204, %v203
    %v218 = vpack.c.b16 %v206, %v205
    %v219 = vpack.c.b16 %v208, %v207
    %v220 = vpack.c.b16 %v210, %v209
    %v221 = vpack.c.b16 %v212, %v211
    %v222 = vpack.c.b16 %v214, %v213
    %231 = vmatprep.subr.bf16.mxu0 0
    %232 = vmatpush1.bf16.xpose.msra.mxu0 %v222
    %233 = vmatprep.subr.bf16.mxu0 0
    %234 = vmatpush1.bf16.xpose.msra.mxu0 %v221
    %235 = vmatprep.subr.bf16.mxu0 0
    %236 = vmatpush1.bf16.xpose.msra.mxu0 %v220
    %237 = vmatprep.subr.bf16.mxu0 0
    %238 = vmatpush1.bf16.xpose.msra.mxu0 %v219
    %239 = vmatprep.subr.bf16.mxu0 0
    %240 = vmatpush1.bf16.xpose.msra.mxu0 %v218
    %241 = vmatprep.subr.bf16.mxu0 0
    %242 = vmatpush1.bf16.xpose.msra.mxu0 %v217
    %243 = vmatprep.subr.bf16.mxu0 0
    %244 = vmatpush1.bf16.xpose.msra.mxu0 %v216
    %245 = vmatprep.subr.bf16.mxu0 0
    %246 = vmatpush1.bf16.xpose.msra.mxu0 %v215
    %247 = vmatprep.subr.bf16.mxu0 0
    %248 = vmatpush2.bf16.xpose.msra.mxu0 0
    %249 = vmatprep.subr.bf16.mxu0 0
    %250 = vmatpush2.bf16.xpose.msra.mxu0 0
    %251 = vmatprep.subr.bf16.mxu0 0
    %252 = vmatpush2.bf16.xpose.msra.mxu0 0
    %253 = vmatprep.subr.bf16.mxu0 0
    %254 = vmatpush2.bf16.xpose.msra.mxu0 0
    %255 = vmatprep.subr.bf16.mxu0 0
    %256 = vmatpush2.bf16.xpose.msra.mxu0 0
    %257 = vmatprep.subr.bf16.mxu0 0
    %258 = vmatpush2.bf16.xpose.msra.mxu0 0
    %259 = vmatprep.subr.bf16.mxu0 0
    %260 = vmatpush2.bf16.xpose.msra.mxu0 0
    %261 = vmatprep.subr.bf16.mxu0 0
    %262 = vmatpush2.bf16.xpose.msra.mxu0 0
    %263 = vmatprep.mubr.bf16.mxu0 0
    %264 = vmatmul.mubr.bf16.gmra.mxu0 %v176
    %v265 = vpop.f32.mrf.mxu0
    %v266 = vadd.f32 %v181, %v265
    %v267 = vpop.f32.mrf.mxu0
    %v268 = vpop.f32.mrf.mxu0
    %v269 = vpop.f32.mrf.mxu0
    %270 = vdwg.mxu0
    %v271 = vmul.f32 %v42, %v266
    %v272 = vadd.f32 %v156, %v271
    %s273 = scalar_lea.vmem [#allocation5], 128
    %v274 = vld [vmem:[%s273] sm:$0xf]
    %v275 = vld [vmem:[%s273 + $0x4] sm:$0xf]
    %v276 = vld [vmem:[%s273 + $0x8] sm:$0xf]
    %v277 = vld [vmem:[%s273 + $0xc] sm:$0xf]
    %v278 = vld [vmem:[%s273 + $0x10] sm:$0xf]
    %v279 = vld [vmem:[%s273 + $0x14] sm:$0xf]
    %v280 = vld [vmem:[%s273 + $0x18] sm:$0xf]
    %v281 = vld [vmem:[%s273 + $0x1c] sm:$0xf]
    %v282 = vld [vmem:[%s273 + $0x20] sm:$0xf]
    %v283 = vld [vmem:[%s273 + $0x24] sm:$0xf]
    %v284 = vld [vmem:[%s273 + $0x28] sm:$0xf]
    %v285 = vld [vmem:[%s273 + $0x2c] sm:$0xf]
    %v286 = vld [vmem:[%s273 + $0x30] sm:$0xf]
    %v287 = vld [vmem:[%s273 + $0x34] sm:$0xf]
    %v288 = vld [vmem:[%s273 + $0x38] sm:$0xf]
    %v289 = vld [vmem:[%s273 + $0x3c] sm:$0xf]
    %s290 = scalar_lea.vmem %s2, 2
    %v291 = vld [vmem:[%s290] sm:$0x1]
    %v292 = vpack.c.bf16 %v272, %v272
    %v294 = vlaneseq
    %v295 = vshrl.u32 %v294, 7
    %v296 = vsub.s32 0, %v295
    %v297 = vrot.slane %v291, %v296
    %v315 = vunpack.c.l.b16 %v274
    %v316 = vunpack.c.l.b16 %v275
    %v317 = vunpack.c.l.b16 %v276
    %v318 = vunpack.c.l.b16 %v277
    %v319 = vunpack.c.l.b16 %v278
    %v320 = vunpack.c.l.b16 %v279
    %v321 = vunpack.c.l.b16 %v280
    %v322 = vunpack.c.l.b16 %v281
    %v323 = vunpack.c.l.b16 %v282
    %v324 = vunpack.c.l.b16 %v283
    %v325 = vunpack.c.l.b16 %v284
    %v326 = vunpack.c.l.b16 %v285
    %v327 = vunpack.c.l.b16 %v286
    %v328 = vunpack.c.l.b16 %v287
    %v329 = vunpack.c.l.b16 %v288
    %v330 = vunpack.c.l.b16 %v289
    %v331 = vpack.c.b16 %v316, %v315
    %v332 = vpack.c.b16 %v318, %v317
    %v333 = vpack.c.b16 %v320, %v319
    %v334 = vpack.c.b16 %v322, %v321
    %v335 = vpack.c.b16 %v324, %v323
    %v336 = vpack.c.b16 %v326, %v325
    %v337 = vpack.c.b16 %v328, %v327
    %v338 = vpack.c.b16 %v330, %v329
    %347 = vmatprep.subr.bf16.mxu0 0
    %348 = vmatpush1.bf16.xpose.msra.mxu0 %v338
    %349 = vmatprep.subr.bf16.mxu0 0
    %350 = vmatpush1.bf16.xpose.msra.mxu0 %v337
    %351 = vmatprep.subr.bf16.mxu0 0
    %352 = vmatpush1.bf16.xpose.msra.mxu0 %v336
    %353 = vmatprep.subr.bf16.mxu0 0
    %354 = vmatpush1.bf16.xpose.msra.mxu0 %v335
    %355 = vmatprep.subr.bf16.mxu0 0
    %356 = vmatpush1.bf16.xpose.msra.mxu0 %v334
    %357 = vmatprep.subr.bf16.mxu0 0
    %358 = vmatpush1.bf16.xpose.msra.mxu0 %v333
    %359 = vmatprep.subr.bf16.mxu0 0
    %360 = vmatpush1.bf16.xpose.msra.mxu0 %v332
    %361 = vmatprep.subr.bf16.mxu0 0
    %362 = vmatpush1.bf16.xpose.msra.mxu0 %v331
    %363 = vmatprep.subr.bf16.mxu0 0
    %364 = vmatpush2.bf16.xpose.msra.mxu0 0
    %365 = vmatprep.subr.bf16.mxu0 0
    %366 = vmatpush2.bf16.xpose.msra.mxu0 0
    %367 = vmatprep.subr.bf16.mxu0 0
    %368 = vmatpush2.bf16.xpose.msra.mxu0 0
    %369 = vmatprep.subr.bf16.mxu0 0
    %370 = vmatpush2.bf16.xpose.msra.mxu0 0
    %371 = vmatprep.subr.bf16.mxu0 0
    %372 = vmatpush2.bf16.xpose.msra.mxu0 0
    %373 = vmatprep.subr.bf16.mxu0 0
    %374 = vmatpush2.bf16.xpose.msra.mxu0 0
    %375 = vmatprep.subr.bf16.mxu0 0
    %376 = vmatpush2.bf16.xpose.msra.mxu0 0
    %377 = vmatprep.subr.bf16.mxu0 0
    %378 = vmatpush2.bf16.xpose.msra.mxu0 0
    %379 = vmatprep.mubr.bf16.mxu0 0
    %380 = vmatmul.mubr.bf16.gmra.mxu0 %v292
    %v381 = vpop.f32.mrf.mxu0
    %v382 = vadd.f32 %v297, %v381
    %v383 = vpop.f32.mrf.mxu0
    %v384 = vpop.f32.mrf.mxu0
    %v385 = vpop.f32.mrf.mxu0
    %386 = vdwg.mxu0
    %v387 = vmul.f32 %v42, %v382
    %v388 = vadd.f32 %v272, %v387
    %389 = vst [vmem:[#allocation7] sm:$0xff] %v388
    // Predicated region
    $region22: #{tpu_custom_call.1} parent=1 // pred_check
      _
    $region23: #{tpu_custom_call.1} parent=1 // pred_check_branch
      %391 = sbr.rel (0) target = $region25
    $region24: #{tpu_custom_call.1} parent=1 // pred_region
      %s393 = ssub.s32 128, 128
      %394 = vsyncadd [#allocation4], %s393
      %s396 = sshll.u32 [#allocation7], 4
      %s397 = int_to_ptr.vmem [resolvable:$true] %s396
      %399 = dma.vmem_to_hbm [thread:$0]  %s397, 128, %s3, [#allocation4]
    $region25: #{tpu_custom_call.1} parent=1 // pred_fallthru
      _
    // Predicated region
    $region26: #{tpu_custom_call.1} parent=1 // pred_check
      _
    $region27: #{tpu_custom_call.1} parent=1 // pred_check_branch
      %401 = sbr.rel (0) target = $region29
    $region28: #{tpu_custom_call.1} parent=1 // pred_region
      %402 = dma.done [#allocation4], 128
    $region29: #{tpu_custom_call.1} parent=1 // pred_fallthru
      _
    %403 = vsyncpa [#allocation3], 1
    %404 = vsyncpa [#allocation6], 1
    %405 = vsyncpa [#allocation4], 1

// kernel: tpu_custom_call.1
$region0: #{tpu_custom_call.1}
  #allocation0 [shape = 'u32[]', space=smem, size = 0x4, offset = 0x4, fixed_abs, tag = 'smem constant byte address 0x4 - core index']
  #allocation1 [shape = 'u32[144,128]{1,0:T(1,128)}', space=vmem, size = 0x12000, scoped, tag = 'internal scratch']
  %s0 = inlined_call_operand.hbm [shape: f32[8,128], index: 0, kind: input, shape index: {}]
  %s1 = inlined_call_operand.hbm [shape: bf16[3,128,128], index: 1, kind: input, shape index: {}]
  %s2 = inlined_call_operand.vmem [shape: f32[3,1,128], index: 2, kind: input, shape index: {}]
  %s3 = inlined_call_operand.hbm [shape: f32[8,128], index: 3, kind: output, shape index: {}]
  %s4 = sld [smem:[#allocation0]]
  $region30: #{tpu_custom_call.1} parent=0
    _
  %s6 = ssub.s32 1, %s4
  %s7 = scalar_select 0, %s6, %s4
  $region1: #{tpu_custom_call.1} parent=0
    #allocation2 [shape = 'u8[4096]{0}', space=vmem, size = 0x1000, scoped, tag = 'input window, operand 0, single buffered']
    #allocation3 [shape = 's32[1]{0}', space=sflag, size = 0x4, scoped, tag = 'scoped memory for tpu_custom_call.1']
    #allocation4 [shape = 's32[1]{0}', space=sflag, size = 0x4, scoped, tag = 'scoped memory for tpu_custom_call.1']
    #allocation5 [shape = 'u8[98304]{0}', space=vmem, size = 0x18000, scoped, tag = 'input window, operand 1, single buffered']
    #allocation6 [shape = 's32[1]{0}', space=sflag, size = 0x4, scoped, tag = 'scoped memory for tpu_custom_call.1']
    #allocation7 [shape = 'u8[4096]{0}', space=vmem, size = 0x1000, scoped, tag = 'output window, operand 0, single buffered']
    %8 = vsyncpa [#allocation3], 0
    %9 = vsyncpa [#allocation6], 0
    %10 = vsyncpa [#allocation4], 0
    // Predicated region
    $region2: #{tpu_custom_call.1} parent=1 // pred_check
      _
    $region3: #{tpu_custom_call.1} parent=1 // pred_check_branch
      %12 = sbr.rel (0) target = $region5
    $region4: #{tpu_custom_call.1} parent=1 // pred_region
      %s14 = ssub.s32 128, 128
      %15 = vsyncadd [#allocation3], %s14
      %s17 = sshll.u32 [#allocation2], 4
      %s18 = int_to_ptr.vmem [resolvable:$true] %s17
      %20 = dma.hbm_to_vmem [thread:$0]  %s0, 128, %s18, [#allocation3]
    $region5: #{tpu_custom_call.1} parent=1 // pred_fallthru
      _
    // Predicated region
    $region6: #{tpu_custom_call.1} parent=1 // pred_check
      _
    $region7: #{tpu_custom_call.1} parent=1 // pred_check_branch
      %22 = sbr.rel (0) target = $region9
    $region8: #{tpu_custom_call.1} parent=1 // pred_region
      %s24 = ssub.s32 3072, 3072
      %25 = vsyncadd [#allocation6], %s24
      %s26 = sshll.u32 [#allocation5], 4
      %s27 = int_to_ptr.vmem [resolvable:$true] %s26
      %32 = dma.hbm_to_vmem [thread:$0]  %s1, 3072, %s27, [#allocation6], 64, 64, 4
    $region9: #{tpu_custom_call.1} parent=1 // pred_fallthru
      _
    // Predicated region
    $region10: #{tpu_custom_call.1} parent=1 // pred_check
      _
    $region11: #{tpu_custom_call.1} parent=1 // pred_check_branch
      %34 = sbr.rel (0) target = $region13
    $region12: #{tpu_custom_call.1} parent=1 // pred_region
      _
    $region13: #{tpu_custom_call.1} parent=1 // pred_fallthru
      _
    // Predicated region
    $region14: #{tpu_custom_call.1} parent=1 // pred_check
      _
    $region15: #{tpu_custom_call.1} parent=1 // pred_check_branch
      %36 = sbr.rel (0) target = $region17
    $region16: #{tpu_custom_call.1} parent=1 // pred_region
      %37 = dma.done [#allocation3], 128
    $region17: #{tpu_custom_call.1} parent=1 // pred_fallthru
      _
    // Predicated region
    $region18: #{tpu_custom_call.1} parent=1 // pred_check
      _
    $region19: #{tpu_custom_call.1} parent=1 // pred_check_branch
      %39 = sbr.rel (0) target = $region21
    $region20: #{tpu_custom_call.1} parent=1 // pred_region
      %40 = dma.done [#allocation6], 3072
    $region21: #{tpu_custom_call.1} parent=1 // pred_fallthru
      _
    %v42 = vld [vmem:[#allocation2] sm:$0xff]
    %v43 = vld [vmem:[#allocation5] sm:$0xf]
    %v44 = vld [vmem:[#allocation5 + $0x4] sm:$0xf]
    %v45 = vld [vmem:[#allocation5 + $0x8] sm:$0xf]
    %v46 = vld [vmem:[#allocation5 + $0xc] sm:$0xf]
    %v47 = vld [vmem:[#allocation5 + $0x10] sm:$0xf]
    %v48 = vld [vmem:[#allocation5 + $0x14] sm:$0xf]
    %v49 = vld [vmem:[#allocation5 + $0x18] sm:$0xf]
    %v50 = vld [vmem:[#allocation5 + $0x1c] sm:$0xf]
    %v51 = vld [vmem:[#allocation5 + $0x20] sm:$0xf]
    %v52 = vld [vmem:[#allocation5 + $0x24] sm:$0xf]
    %v53 = vld [vmem:[#allocation5 + $0x28] sm:$0xf]
    %v54 = vld [vmem:[#allocation5 + $0x2c] sm:$0xf]
    %v55 = vld [vmem:[#allocation5 + $0x30] sm:$0xf]
    %v56 = vld [vmem:[#allocation5 + $0x34] sm:$0xf]
    %v57 = vld [vmem:[#allocation5 + $0x38] sm:$0xf]
    %v58 = vld [vmem:[#allocation5 + $0x3c] sm:$0xf]
    %v59 = vld [vmem:[%s2] sm:$0x1]
    %v60 = vpack.c.bf16 %v42, %v42
    %v62 = vlaneseq
    %v63 = vshrl.u32 %v62, 7
    %v64 = vsub.s32 0, %v63
    %v65 = vrot.slane %v59, %v64
    %v83 = vunpack.c.l.b16 %v43
    %v84 = vunpack.c.l.b16 %v44
    %v85 = vunpack.c.l.b16 %v45
    %v86 = vunpack.c.l.b16 %v46
    %v87 = vunpack.c.l.b16 %v47
    %v88 = vunpack.c.l.b16 %v48
    %v89 = vunpack.c.l.b16 %v49
    %v90 = vunpack.c.l.b16 %v50
    %v91 = vunpack.c.l.b16 %v51
    %v92 = vunpack.c.l.b16 %v52
    %v93 = vunpack.c.l.b16 %v53
    %v94 = vunpack.c.l.b16 %v54
    %v95 = vunpack.c.l.b16 %v55
    %v96 = vunpack.c.l.b16 %v56
    %v97 = vunpack.c.l.b16 %v57
    %v98 = vunpack.c.l.b16 %v58
    %v99 = vpack.c.b16 %v84, %v83
    %v100 = vpack.c.b16 %v86, %v85
    %v101 = vpack.c.b16 %v88, %v87
    %v102 = vpack.c.b16 %v90, %v89
    %v103 = vpack.c.b16 %v92, %v91
    %v104 = vpack.c.b16 %v94, %v93
    %v105 = vpack.c.b16 %v96, %v95
    %v106 = vpack.c.b16 %v98, %v97
    %115 = vmatprep.subr.bf16.mxu0 0
    %116 = vmatpush1.bf16.xpose.msra.mxu0 %v106
    %117 = vmatprep.subr.bf16.mxu0 0
    %118 = vmatpush1.bf16.xpose.msra.mxu0 %v105
    %119 = vmatprep.subr.bf16.mxu0 0
    %120 = vmatpush1.bf16.xpose.msra.mxu0 %v104
    %121 = vmatprep.subr.bf16.mxu0 0
    %122 = vmatpush1.bf16.xpose.msra.mxu0 %v103
    %123 = vmatprep.subr.bf16.mxu0 0
    %124 = vmatpush1.bf16.xpose.msra.mxu0 %v102
    %125 = vmatprep.subr.bf16.mxu0 0
    %126 = vmatpush1.bf16.xpose.msra.mxu0 %v101
    %127 = vmatprep.subr.bf16.mxu0 0
    %128 = vmatpush1.bf16.xpose.msra.mxu0 %v100
    %129 = vmatprep.subr.bf16.mxu0 0
    %130 = vmatpush1.bf16.xpose.msra.mxu0 %v99
    %131 = vmatprep.subr.bf16.mxu0 0
    %132 = vmatpush2.bf16.xpose.msra.mxu0 0
    %133 = vmatprep.subr.bf16.mxu0 0
    %134 = vmatpush2.bf16.xpose.msra.mxu0 0
    %135 = vmatprep.subr.bf16.mxu0 0
    %136 = vmatpush2.bf16.xpose.msra.mxu0 0
    %137 = vmatprep.subr.bf16.mxu0 0
    %138 = vmatpush2.bf16.xpose.msra.mxu0 0
    %139 = vmatprep.subr.bf16.mxu0 0
    %140 = vmatpush2.bf16.xpose.msra.mxu0 0
    %141 = vmatprep.subr.bf16.mxu0 0
    %142 = vmatpush2.bf16.xpose.msra.mxu0 0
    %143 = vmatprep.subr.bf16.mxu0 0
    %144 = vmatpush2.bf16.xpose.msra.mxu0 0
    %145 = vmatprep.subr.bf16.mxu0 0
    %146 = vmatpush2.bf16.xpose.msra.mxu0 0
    %147 = vmatprep.mubr.bf16.mxu0 0
    %148 = vmatmul.mubr.bf16.gmra.mxu0 %v60
    %v149 = vpop.f32.mrf.mxu0
    %v150 = vadd.f32 %v65, %v149
    %v151 = vpop.f32.mrf.mxu0
    %v152 = vpop.f32.mrf.mxu0
    %v153 = vpop.f32.mrf.mxu0
    %154 = vdwg.mxu0
    %v155 = vmul.f32 %v42, %v150
    %v156 = vadd.f32 %v42, %v155
    %s157 = scalar_lea.vmem [#allocation5], 64
    %v158 = vld [vmem:[%s157] sm:$0xf]
    %v159 = vld [vmem:[%s157 + $0x4] sm:$0xf]
    %v160 = vld [vmem:[%s157 + $0x8] sm:$0xf]
    %v161 = vld [vmem:[%s157 + $0xc] sm:$0xf]
    %v162 = vld [vmem:[%s157 + $0x10] sm:$0xf]
    %v163 = vld [vmem:[%s157 + $0x14] sm:$0xf]
    %v164 = vld [vmem:[%s157 + $0x18] sm:$0xf]
    %v165 = vld [vmem:[%s157 + $0x1c] sm:$0xf]
    %v166 = vld [vmem:[%s157 + $0x20] sm:$0xf]
    %v167 = vld [vmem:[%s157 + $0x24] sm:$0xf]
    %v168 = vld [vmem:[%s157 + $0x28] sm:$0xf]
    %v169 = vld [vmem:[%s157 + $0x2c] sm:$0xf]
    %v170 = vld [vmem:[%s157 + $0x30] sm:$0xf]
    %v171 = vld [vmem:[%s157 + $0x34] sm:$0xf]
    %v172 = vld [vmem:[%s157 + $0x38] sm:$0xf]
    %v173 = vld [vmem:[%s157 + $0x3c] sm:$0xf]
    %s174 = scalar_lea.vmem %s2, 1
    %v175 = vld [vmem:[%s174] sm:$0x1]
    %v176 = vpack.c.bf16 %v156, %v156
    %v178 = vlaneseq
    %v179 = vshrl.u32 %v178, 7
    %v180 = vsub.s32 0, %v179
    %v181 = vrot.slane %v175, %v180
    %v199 = vunpack.c.l.b16 %v158
    %v200 = vunpack.c.l.b16 %v159
    %v201 = vunpack.c.l.b16 %v160
    %v202 = vunpack.c.l.b16 %v161
    %v203 = vunpack.c.l.b16 %v162
    %v204 = vunpack.c.l.b16 %v163
    %v205 = vunpack.c.l.b16 %v164
    %v206 = vunpack.c.l.b16 %v165
    %v207 = vunpack.c.l.b16 %v166
    %v208 = vunpack.c.l.b16 %v167
    %v209 = vunpack.c.l.b16 %v168
    %v210 = vunpack.c.l.b16 %v169
    %v211 = vunpack.c.l.b16 %v170
    %v212 = vunpack.c.l.b16 %v171
    %v213 = vunpack.c.l.b16 %v172
    %v214 = vunpack.c.l.b16 %v173
    %v215 = vpack.c.b16 %v200, %v199
    %v216 = vpack.c.b16 %v202, %v201
    %v217 = vpack.c.b16 %v204, %v203
    %v218 = vpack.c.b16 %v206, %v205
    %v219 = vpack.c.b16 %v208, %v207
    %v220 = vpack.c.b16 %v210, %v209
    %v221 = vpack.c.b16 %v212, %v211
    %v222 = vpack.c.b16 %v214, %v213
    %231 = vmatprep.subr.bf16.mxu0 0
    %232 = vmatpush1.bf16.xpose.msra.mxu0 %v222
    %233 = vmatprep.subr.bf16.mxu0 0
    %234 = vmatpush1.bf16.xpose.msra.mxu0 %v221
    %235 = vmatprep.subr.bf16.mxu0 0
    %236 = vmatpush1.bf16.xpose.msra.mxu0 %v220
    %237 = vmatprep.subr.bf16.mxu0 0
    %238 = vmatpush1.bf16.xpose.msra.mxu0 %v219
    %239 = vmatprep.subr.bf16.mxu0 0
    %240 = vmatpush1.bf16.xpose.msra.mxu0 %v218
    %241 = vmatprep.subr.bf16.mxu0 0
    %242 = vmatpush1.bf16.xpose.msra.mxu0 %v217
    %243 = vmatprep.subr.bf16.mxu0 0
    %244 = vmatpush1.bf16.xpose.msra.mxu0 %v216
    %245 = vmatprep.subr.bf16.mxu0 0
    %246 = vmatpush1.bf16.xpose.msra.mxu0 %v215
    %247 = vmatprep.subr.bf16.mxu0 0
    %248 = vmatpush2.bf16.xpose.msra.mxu0 0
    %249 = vmatprep.subr.bf16.mxu0 0
    %250 = vmatpush2.bf16.xpose.msra.mxu0 0
    %251 = vmatprep.subr.bf16.mxu0 0
    %252 = vmatpush2.bf16.xpose.msra.mxu0 0
    %253 = vmatprep.subr.bf16.mxu0 0
    %254 = vmatpush2.bf16.xpose.msra.mxu0 0
    %255 = vmatprep.subr.bf16.mxu0 0
    %256 = vmatpush2.bf16.xpose.msra.mxu0 0
    %257 = vmatprep.subr.bf16.mxu0 0
    %258 = vmatpush2.bf16.xpose.msra.mxu0 0
    %259 = vmatprep.subr.bf16.mxu0 0
    %260 = vmatpush2.bf16.xpose.msra.mxu0 0
    %261 = vmatprep.subr.bf16.mxu0 0
    %262 = vmatpush2.bf16.xpose.msra.mxu0 0
    %263 = vmatprep.mubr.bf16.mxu0 0
    %264 = vmatmul.mubr.bf16.gmra.mxu0 %v176
    %v265 = vpop.f32.mrf.mxu0
    %v266 = vadd.f32 %v181, %v265
    %v267 = vpop.f32.mrf.mxu0
    %v268 = vpop.f32.mrf.mxu0
    %v269 = vpop.f32.mrf.mxu0
    %270 = vdwg.mxu0
    %v271 = vmul.f32 %v42, %v266
    %v272 = vadd.f32 %v156, %v271
    %s273 = scalar_lea.vmem [#allocation5], 128
    %v274 = vld [vmem:[%s273] sm:$0xf]
    %v275 = vld [vmem:[%s273 + $0x4] sm:$0xf]
    %v276 = vld [vmem:[%s273 + $0x8] sm:$0xf]
    %v277 = vld [vmem:[%s273 + $0xc] sm:$0xf]
    %v278 = vld [vmem:[%s273 + $0x10] sm:$0xf]
    %v279 = vld [vmem:[%s273 + $0x14] sm:$0xf]
    %v280 = vld [vmem:[%s273 + $0x18] sm:$0xf]
    %v281 = vld [vmem:[%s273 + $0x1c] sm:$0xf]
    %v282 = vld [vmem:[%s273 + $0x20] sm:$0xf]
    %v283 = vld [vmem:[%s273 + $0x24] sm:$0xf]
    %v284 = vld [vmem:[%s273 + $0x28] sm:$0xf]
    %v285 = vld [vmem:[%s273 + $0x2c] sm:$0xf]
    %v286 = vld [vmem:[%s273 + $0x30] sm:$0xf]
    %v287 = vld [vmem:[%s273 + $0x34] sm:$0xf]
    %v288 = vld [vmem:[%s273 + $0x38] sm:$0xf]
    %v289 = vld [vmem:[%s273 + $0x3c] sm:$0xf]
    %s290 = scalar_lea.vmem %s2, 2
    %v291 = vld [vmem:[%s290] sm:$0x1]
    %v292 = vpack.c.bf16 %v272, %v272
    %v294 = vlaneseq
    %v295 = vshrl.u32 %v294, 7
    %v296 = vsub.s32 0, %v295
    %v297 = vrot.slane %v291, %v296
    %v315 = vunpack.c.l.b16 %v274
    %v316 = vunpack.c.l.b16 %v275
    %v317 = vunpack.c.l.b16 %v276
    %v318 = vunpack.c.l.b16 %v277
    %v319 = vunpack.c.l.b16 %v278
    %v320 = vunpack.c.l.b16 %v279
    %v321 = vunpack.c.l.b16 %v280
    %v322 = vunpack.c.l.b16 %v281
    %v323 = vunpack.c.l.b16 %v282
    %v324 = vunpack.c.l.b16 %v283
    %v325 = vunpack.c.l.b16 %v284
    %v326 = vunpack.c.l.b16 %v285
    %v327 = vunpack.c.l.b16 %v286
    %v328 = vunpack.c.l.b16 %v287
    %v329 = vunpack.c.l.b16 %v288
    %v330 = vunpack.c.l.b16 %v289
    %v331 = vpack.c.b16 %v316, %v315
    %v332 = vpack.c.b16 %v318, %v317
    %v333 = vpack.c.b16 %v320, %v319
    %v334 = vpack.c.b16 %v322, %v321
    %v335 = vpack.c.b16 %v324, %v323
    %v336 = vpack.c.b16 %v326, %v325
    %v337 = vpack.c.b16 %v328, %v327
    %v338 = vpack.c.b16 %v330, %v329
    %347 = vmatprep.subr.bf16.mxu0 0
    %348 = vmatpush1.bf16.xpose.msra.mxu0 %v338
    %349 = vmatprep.subr.bf16.mxu0 0
    %350 = vmatpush1.bf16.xpose.msra.mxu0 %v337
    %351 = vmatprep.subr.bf16.mxu0 0
    %352 = vmatpush1.bf16.xpose.msra.mxu0 %v336
    %353 = vmatprep.subr.bf16.mxu0 0
    %354 = vmatpush1.bf16.xpose.msra.mxu0 %v335
    %355 = vmatprep.subr.bf16.mxu0 0
    %356 = vmatpush1.bf16.xpose.msra.mxu0 %v334
    %357 = vmatprep.subr.bf16.mxu0 0
    %358 = vmatpush1.bf16.xpose.msra.mxu0 %v333
    %359 = vmatprep.subr.bf16.mxu0 0
    %360 = vmatpush1.bf16.xpose.msra.mxu0 %v332
    %361 = vmatprep.subr.bf16.mxu0 0
    %362 = vmatpush1.bf16.xpose.msra.mxu0 %v331
    %363 = vmatprep.subr.bf16.mxu0 0
    %364 = vmatpush2.bf16.xpose.msra.mxu0 0
    %365 = vmatprep.subr.bf16.mxu0 0
    %366 = vmatpush2.bf16.xpose.msra.mxu0 0
    %367 = vmatprep.subr.bf16.mxu0 0
    %368 = vmatpush2.bf16.xpose.msra.mxu0 0
    %369 = vmatprep.subr.bf16.mxu0 0
    %370 = vmatpush2.bf16.xpose.msra.mxu0 0
    %371 = vmatprep.subr.bf16.mxu0 0
    %372 = vmatpush2.bf16.xpose.msra.mxu0 0
    %373 = vmatprep.subr.bf16.mxu0 0
    %374 = vmatpush2.bf16.xpose.msra.mxu0 0
    %375 = vmatprep.subr.bf16.mxu0 0
    %376 = vmatpush2.bf16.xpose.msra.mxu0 0
    %377 = vmatprep.subr.bf16.mxu0 0
    %378 = vmatpush2.bf16.xpose.msra.mxu0 0
    %379 = vmatprep.mubr.bf16.mxu0 0
    %380 = vmatmul.mubr.bf16.gmra.mxu0 %v292
    %v381 = vpop.f32.mrf.mxu0
    %v382 = vadd.f32 %v297, %v381
    %v383 = vpop.f32.mrf.mxu0
    %v384 = vpop.f32.mrf.mxu0
    %v385 = vpop.f32.mrf.mxu0
    %386 = vdwg.mxu0
    %v387 = vmul.f32 %v42, %v382
    %v388 = vadd.f32 %v272, %v387
    %389 = vst [vmem:[#allocation7] sm:$0xff] %v388
    // Predicated region
    $region22: #{tpu_custom_call.1} parent=1 // pred_check
      _
    $region23: #{tpu_custom_call.1} parent=1 // pred_check_branch
      %391 = sbr.rel (0) target = $region25
    $region24: #{tpu_custom_call.1} parent=1 // pred_region
      %s393 = ssub.s32 128, 128
      %394 = vsyncadd [#allocation4], %s393
      %s396 = sshll.u32 [#allocation7], 4
      %s397 = int_to_ptr.vmem [resolvable:$true] %s396
      %399 = dma.vmem_to_hbm [thread:$0]  %s397, 128, %s3, [#allocation4]
    $region25: #{tpu_custom_call.1} parent=1 // pred_fallthru
      _
    // Predicated region
    $region26: #{tpu_custom_call.1} parent=1 // pred_check
      _
    $region27: #{tpu_custom_call.1} parent=1 // pred_check_branch
      %401 = sbr.rel (0) target = $region29
    $region28: #{tpu_custom_call.1} parent=1 // pred_region
      %402 = dma.done [#allocation4], 128
    $region29: #{tpu_custom_call.1} parent=1 // pred_fallthru
      _
    %403 = vsyncpa [#allocation3], 1
    %404 = vsyncpa [#allocation6], 1
    %405 = vsyncpa [#allocation4], 1

</llo_original>
